<compile_context>
chip_gen: v7x
topology: tpu7x:2x2x1
jax: 0.10.0
libtpu: 0.0.40
codegen_flags: <defaults>
</compile_context>

<pallas_src>
import jax
import jax.numpy as jnp
from jax.experimental import pallas as pl
from jax.experimental.pallas import tpu as pltpu

HP = 128      # lane-padded hidden width (hidden1, hidden2 <= 128)
CP = 128      # lane-padded class width  (num_classes <= 128)
NEG = -1e30   # "minus infinity" bias for padded class lanes


def classifier_kernel(x_ref, w1_ref, w23_ref, b_ref, o_ref):
    # x tile streamed from HBM (bf16 or f32); weights/biases are VMEM-resident.
    b1 = b_ref[0:1, :]                                        # (1, HP)
    b2 = b_ref[1:2, :]                                        # (1, HP)
    b3 = b_ref[2:3, :]                                        # (1, CP), padded lanes = NEG

    # fc1 + ReLU.  x goes to the MXU in its streamed dtype; accumulation is
    # f32, matching the module's `.float()` math.  Padded h1 lanes are 0.
    h1 = jnp.dot(x_ref[...], w1_ref[...],
                 preferred_element_type=jnp.float32) + b1
    h1 = jnp.maximum(h1, 0.0)

    # fc2 + ReLU  (padded h2 lanes are exactly 0)
    h2 = jnp.dot(h1, w23_ref[0], preferred_element_type=jnp.float32) + b2
    h2 = jnp.maximum(h2, 0.0)

    # fc3 -> logits; padded class lanes sit at ~NEG and vanish in softmax
    logits = jnp.dot(h2, w23_ref[1], preferred_element_type=jnp.float32) + b3

    # Numerically stable log-softmax over the (padded) class axis.
    m = jnp.max(logits, axis=-1, keepdims=True)
    shifted = logits - m
    lse = jnp.log(jnp.sum(jnp.exp(shifted), axis=-1, keepdims=True))
    logp = shifted - lse                                      # (TB, CP)

    o_ref[...] = logp[:, : o_ref.shape[-1]].astype(o_ref.dtype)


def _pad_params(params):
    """Zero-pad weights to lane-dense (128-wide) shapes and pack them."""
    w1, b1, w2, b2, w3, b3 = params
    f32 = jnp.float32
    F, H1 = w1.shape
    H2 = w2.shape[1]
    C = w3.shape[1]

    w1p = jnp.zeros((F, HP), f32).at[:, :H1].set(w1.astype(f32))
    w2p = jnp.zeros((HP, HP), f32).at[:H1, :H2].set(w2.astype(f32))
    w3p = jnp.zeros((HP, CP), f32).at[:H2, :C].set(w3.astype(f32))
    w23 = jnp.stack([w2p, w3p])                               # (2, HP, HP)

    b1p = jnp.zeros((HP,), f32).at[:H1].set(b1.reshape(-1).astype(f32))
    b2p = jnp.zeros((HP,), f32).at[:H2].set(b2.reshape(-1).astype(f32))
    b3p = jnp.full((CP,), NEG, f32).at[:C].set(b3.reshape(-1).astype(f32))
    bias = jnp.stack([b1p, b2p, b3p])                         # (3, HP)

    return w1p, w23, bias, C


def _choose_batch_tile(B, F, itemsize):
    """Batch tile sized so the per-step VMEM footprint (double-buffered x rows
    + f32 intermediates + output rows) stays within ~8 MiB, then capped so the
    grid has >=2 (ideally >=4) steps when the batch allows it."""
    per_row = 2 * F * itemsize + 6 * HP * 4 + 2 * CP * 4
    budget = 8 * 1024 * 1024
    tb = (budget // per_row) // 8 * 8
    tb = max(8, min(2048, tb))                # keep the 2048 clamp (v6e advice)

    if B > 8:
        # Guarantee multiple grid steps: megacore split on v7x + DMA overlap.
        min_steps = 4 if B >= 32 else 2
        cap = -(-B // min_steps)              # cdiv
        cap = max(8, ((cap + 7) // 8) * 8)    # sublane-aligned
        tb = min(tb, cap)

    return B if tb >= B else tb


def classifier_forward(inputs, params):
    """inputs: (B, 1, F), any float dtype (bf16 recommended for bandwidth);
    returns (B, 5) float32 log-probs."""
    x = jnp.squeeze(inputs, axis=1)                           # (B, F), producer dtype
    B, F = x.shape
    w1p, w23, bias, C = _pad_params(params)

    TB = _choose_batch_tile(B, F, x.dtype.itemsize)
    grid = (pl.cdiv(B, TB),)

    flops = 2 * B * (F * HP + HP * HP + HP * CP)
    bytes_accessed = (B * F * x.dtype.itemsize
                      + (w1p.size + w23.size + bias.size) * 4
                      + B * C * 4)
    cost = pl.CostEstimate(flops=flops,
                           transcendentals=B * (CP + 1),
                           bytes_accessed=bytes_accessed)

    # Explicit VMEM ceiling: computed footprint * 2 margin, floored at the
    # portable 16 MiB default and capped at 48 MiB (< v7x's 64 MiB physical).
    est = (2 * TB * F * x.dtype.itemsize          # double-buffered x tiles
           + (w1p.size + w23.size + bias.size) * 4  # resident, single-buffered
           + 2 * TB * C * 4                        # double-buffered output tiles
           + 8 * TB * HP * 4)                      # f32 intermediates (generous)
    vmem_limit = int(min(48 * 1024 * 1024, max(16 * 1024 * 1024, 2 * est)))

    return pl.pallas_call(
        classifier_kernel,
        out_shape=jax.ShapeDtypeStruct((B, C), jnp.float32),
        grid=grid,
        in_specs=[
            # streamed batch tile (double-buffered by the pipeline)
            pl.BlockSpec((TB, F), lambda i: (i, 0)),
            # resident, single-buffered parameters (no per-step DMA)
            pl.BlockSpec(memory_space=pltpu.MemorySpace.VMEM),   # fc1 weight
            pl.BlockSpec(memory_space=pltpu.MemorySpace.VMEM),   # fc2/fc3 weights
            pl.BlockSpec(memory_space=pltpu.MemorySpace.VMEM),   # packed biases
        ],
        out_specs=pl.BlockSpec((TB, C), lambda i: (i, 0)),
        compiler_params=pltpu.CompilerParams(
            dimension_semantics=("parallel",),    # megacore split on v7x
            vmem_limit_bytes=vmem_limit),
        cost_estimate=cost,
    )(x, w1p, w23, bias)


def init_params(key, in_features, hidden1=16, hidden2=16, num_classes=5):
    """PyTorch-Linear-style uniform init; weights stored (in, out)."""
    def linear(k, fan_in, fan_out):
        kw, kb = jax.random.split(k)
        bound = 1.0 / jnp.sqrt(float(fan_in))
        w = jax.random.uniform(kw, (fan_in, fan_out), jnp.float32, -bound, bound)
        b = jax.random.uniform(kb, (fan_out,), jnp.float32, -bound, bound)
        return w, b

    k1, k2, k3 = jax.random.split(key, 3)
    w1, b1 = linear(k1, in_features, hidden1)
    w2, b2 = linear(k2, hidden1, hidden2)
    w3, b3 = linear(k3, hidden2, num_classes)
    return (w1, b1, w2, b2, w3, b3)


def reference_forward(inputs, params):
    """Pure-JAX reference mirroring the PyTorch forward."""
    x = jnp.squeeze(inputs, axis=1).astype(jnp.float32)
    w1, b1, w2, b2, w3, b3 = params
    h1 = jnp.maximum(x @ w1 + b1, 0.0)
    h2 = jnp.maximum(h1 @ w2 + b2, 0.0)
    logits = h2 @ w3 + b3
    return jax.nn.log_softmax(logits, axis=-1)


if __name__ == "__main__":
    # Small shapes consistent with the module: max_seq_len=8, emb_dim=32 -> F=256
    max_seq_len = 8
    emb_dim = 32
    F = max_seq_len * emb_dim

    key = jax.random.PRNGKey(0)
    k_in1, k_in2, k_par = jax.random.split(key, 3)
    params = init_params(k_par, F, hidden1=16, hidden2=16, num_classes=5)

    # --- bf16 producer path (bandwidth-optimized), tiny batch (single grid step)
    x_small = jax.random.normal(k_in1, (2, 1, F), jnp.float32).astype(jnp.bfloat16)
    out_small = jax.block_until_ready(classifier_forward(x_small, params))
    ref_small = reference_forward(x_small, params)
    assert out_small.shape == (2, 5)
    row_sums = jnp.sum(jnp.exp(out_small), axis=-1)
    assert bool(jnp.all(jnp.abs(row_sums - 1.0) < 1e-4))
    assert bool(jnp.allclose(out_small, ref_small, atol=2e-3, rtol=2e-3))

    # --- f32 path with a larger batch: exercises multi-step grid (TB=16 -> 4
    #     steps) and a partial last tile (50 % 16 != 0).
    x_big = jax.random.normal(k_in2, (50, 1, F), jnp.float32)
    out_big = jax.block_until_ready(classifier_forward(x_big, params))
    ref_big = reference_forward(x_big, params)
    assert out_big.shape == (50, 5)
    assert bool(jnp.allclose(out_big, ref_big, atol=1e-4, rtol=1e-4))

    print("KERNEL_OK")
</pallas_src>

<mosaic_0001>
module attributes {stable_mosaic.version = 11 : i64} {
  func.func @classifier_kernel(%arg0: i32, %arg1: memref<2x256xbf16, #tpu.memory_space<vmem>>, %arg2: memref<256x128xf32, #tpu.memory_space<vmem>>, %arg3: memref<2x128x128xf32, #tpu.memory_space<vmem>>, %arg4: memref<3x128xf32, #tpu.memory_space<vmem>>, %arg5: memref<2x5xf32, #tpu.memory_space<vmem>>) attributes {dimension_semantics = [#tpu.dimension_semantics<parallel>], iteration_bounds = array<i64: 1>, scalar_prefetch = 0 : i64, scratch_operands = 0 : i64, tpu.core_type = #tpu.core_type<tc>, window_params = [{transform_indices = @transform_0, window_bounds = array<i64: 2, 256>}, {pipeline_mode = #tpu.pipeline_mode<synchronous>, transform_indices = @transform_1, window_bounds = array<i64: 256, 128>}, {pipeline_mode = #tpu.pipeline_mode<synchronous>, transform_indices = @transform_2, window_bounds = array<i64: 2, 128, 128>}, {pipeline_mode = #tpu.pipeline_mode<synchronous>, transform_indices = @transform_3, window_bounds = array<i64: 3, 128>}, {transform_indices = @transform_4, window_bounds = array<i64: 2, 5>}]} {
    %c0 = arith.constant 0 : index
    %c0_0 = arith.constant 0 : index
    %0 = vector.load %arg4[%c0, %c0_0] : memref<3x128xf32, #tpu.memory_space<vmem>>, vector<1x128xf32>
    %c1 = arith.constant 1 : index
    %c0_1 = arith.constant 0 : index
    %1 = vector.load %arg4[%c1, %c0_1] : memref<3x128xf32, #tpu.memory_space<vmem>>, vector<1x128xf32>
    %c2 = arith.constant 2 : index
    %c0_2 = arith.constant 0 : index
    %2 = vector.load %arg4[%c2, %c0_2] : memref<3x128xf32, #tpu.memory_space<vmem>>, vector<1x128xf32>
    %c0_3 = arith.constant 0 : index
    %c0_4 = arith.constant 0 : index
    %3 = vector.load %arg1[%c0_3, %c0_4] : memref<2x256xbf16, #tpu.memory_space<vmem>>, vector<2x256xbf16>
    %c0_5 = arith.constant 0 : index
    %c0_6 = arith.constant 0 : index
    %4 = vector.load %arg2[%c0_5, %c0_6] : memref<256x128xf32, #tpu.memory_space<vmem>>, vector<256x128xf32>
    %cst = arith.constant dense<0.000000e+00> : vector<2x128xf32>
    %5 = tpu.matmul %3, %4, %cst {dimension_numbers = #tpu.dot_dimension_numbers<[1], [0], [0], [1], [0, 0, 1, 1], [], []>} : vector<2x256xbf16>, vector<256x128xf32>, vector<2x128xf32> -> vector<2x128xf32>
    %6 = vector.broadcast %0 : vector<1x128xf32> to vector<2x128xf32>
    %7 = arith.addf %5, %6 : vector<2x128xf32>
    %cst_7 = arith.constant 0.000000e+00 : f32
    %8 = vector.broadcast %cst_7 : f32 to vector<2x128xf32>
    %9 = arith.maximumf %7, %8 : vector<2x128xf32>
    %c0_8 = arith.constant 0 : index
    %c0_9 = arith.constant 0 : index
    %c0_10 = arith.constant 0 : index
    %10 = vector.load %arg3[%c0_8, %c0_9, %c0_10] : memref<2x128x128xf32, #tpu.memory_space<vmem>>, vector<1x128x128xf32>
    %11 = vector.shape_cast %10 : vector<1x128x128xf32> to vector<128x128xf32>
    %cst_11 = arith.constant dense<0.000000e+00> : vector<2x128xf32>
    %12 = tpu.matmul %9, %11, %cst_11 {dimension_numbers = #tpu.dot_dimension_numbers<[1], [0], [0], [1], [0, 0, 1, 1], [], []>} : vector<2x128xf32>, vector<128x128xf32>, vector<2x128xf32> -> vector<2x128xf32>
    %13 = vector.broadcast %1 : vector<1x128xf32> to vector<2x128xf32>
    %14 = arith.addf %12, %13 : vector<2x128xf32>
    %cst_12 = arith.constant 0.000000e+00 : f32
    %15 = vector.broadcast %cst_12 : f32 to vector<2x128xf32>
    %16 = arith.maximumf %14, %15 : vector<2x128xf32>
    %c1_13 = arith.constant 1 : index
    %c0_14 = arith.constant 0 : index
    %c0_15 = arith.constant 0 : index
    %17 = vector.load %arg3[%c1_13, %c0_14, %c0_15] : memref<2x128x128xf32, #tpu.memory_space<vmem>>, vector<1x128x128xf32>
    %18 = vector.shape_cast %17 : vector<1x128x128xf32> to vector<128x128xf32>
    %cst_16 = arith.constant dense<0.000000e+00> : vector<2x128xf32>
    %19 = tpu.matmul %16, %18, %cst_16 {dimension_numbers = #tpu.dot_dimension_numbers<[1], [0], [0], [1], [0, 0, 1, 1], [], []>} : vector<2x128xf32>, vector<128x128xf32>, vector<2x128xf32> -> vector<2x128xf32>
    %20 = vector.broadcast %2 : vector<1x128xf32> to vector<2x128xf32>
    %21 = arith.addf %19, %20 : vector<2x128xf32>
    %cst_17 = arith.constant dense<0xFF800000> : vector<2xf32>
    %22 = vector.multi_reduction <maximumf>, %21, %cst_17 [1] : vector<2x128xf32> to vector<2xf32>
    %23 = vector.shape_cast %22 : vector<2xf32> to vector<2x1xf32>
    %24 = vector.broadcast %23 : vector<2x1xf32> to vector<2x128xf32>
    %25 = arith.subf %21, %24 : vector<2x128xf32>
    %26 = math.exp %25 : vector<2x128xf32>
    %cst_18 = arith.constant dense<0.000000e+00> : vector<2xf32>
    %27 = vector.multi_reduction <add>, %26, %cst_18 [1] : vector<2x128xf32> to vector<2xf32>
    %28 = vector.shape_cast %27 : vector<2xf32> to vector<2x1xf32>
    %29 = math.log %28 : vector<2x1xf32>
    %30 = vector.broadcast %29 : vector<2x1xf32> to vector<2x128xf32>
    %31 = arith.subf %25, %30 : vector<2x128xf32>
    %32 = vector.extract_strided_slice %31 {offsets = [0, 0], sizes = [2, 5], strides = [1, 1]} : vector<2x128xf32> to vector<2x5xf32>
    %c0_19 = arith.constant 0 : index
    %c0_20 = arith.constant 0 : index
    %33 = vector.load %arg5[%c0_19, %c0_20] : memref<2x5xf32, #tpu.memory_space<vmem>>, vector<2x5xf32>
    tpu.vector_store %arg5[%c0_19, %c0_20], %32 {strides = array<i32>} : memref<2x5xf32, #tpu.memory_space<vmem>>, vector<2x5xf32>,
    return
  }
  func.func @transform_0(%arg0: i32) -> (i32, i32) {
    %c0_i32 = arith.constant 0 : i32
    %c0_i32_0 = arith.constant 0 : i32
    return %arg0, %c0_i32 : i32, i32
  }
  func.func @transform_1(%arg0: i32) -> (i32, i32) {
    %c0_i32 = arith.constant 0 : i32
    %c0_i32_0 = arith.constant 0 : i32
    %c0_i32_1 = arith.constant 0 : i32
    return %c0_i32, %c0_i32_0 : i32, i32
  }
  func.func @transform_2(%arg0: i32) -> (i32, i32, i32) {
    %c0_i32 = arith.constant 0 : i32
    %c0_i32_0 = arith.constant 0 : i32
    %c0_i32_1 = arith.constant 0 : i32
    %c0_i32_2 = arith.constant 0 : i32
    return %c0_i32, %c0_i32_0, %c0_i32_1 : i32, i32, i32
  }
  func.func @transform_3(%arg0: i32) -> (i32, i32) {
    %c0_i32 = arith.constant 0 : i32
    %c0_i32_0 = arith.constant 0 : i32
    %c0_i32_1 = arith.constant 0 : i32
    return %c0_i32, %c0_i32_0 : i32, i32
  }
  func.func @transform_4(%arg0: i32) -> (i32, i32) {
    %c0_i32 = arith.constant 0 : i32
    %c0_i32_0 = arith.constant 0 : i32
    return %arg0, %c0_i32 : i32, i32
  }
}

</mosaic_0001>

<llo_original>
// kernel: tpu_custom_call.1
$region0: #{tpu_custom_call.1}
  #allocation0 [shape = 'u32[]', space=smem, size = 0x4, offset = 0x4, fixed_abs, tag = 'smem constant byte address 0x4 - core index']
  #allocation1 [shape = 'u32[144,128]{1,0:T(1,128)}', space=vmem, size = 0x12000, scoped, tag = 'internal scratch']
  %s0 = inlined_call_operand.hbm [shape: bf16[2,256], index: 0, kind: input, shape index: {}]
  %s1 = inlined_call_operand.hbm [shape: f32[256,128], index: 1, kind: input, shape index: {}]
  %s2 = inlined_call_operand.hbm [shape: f32[2,128,128], index: 2, kind: input, shape index: {}]
  %s3 = inlined_call_operand.vmem [shape: f32[3,128], index: 3, kind: input, shape index: {}]
  %s4 = inlined_call_operand.hbm [shape: f32[2,5], index: 4, kind: output, shape index: {}]
  %s5 = sld [smem:[#allocation0]]
  $region38: #{tpu_custom_call.1} parent=0
    _
  %s7 = ssub.s32 1, %s5
  %s8 = scalar_select 0, %s7, %s5
  $region1: #{tpu_custom_call.1} parent=0
    #allocation2 [shape = 'u8[1024]{0}', space=vmem, size = 0x400, scoped, tag = 'input window, operand 0, single buffered']
    #allocation3 [shape = 's32[1]{0}', space=sflag, size = 0x4, scoped, tag = 'scoped memory for tpu_custom_call.1']
    #allocation4 [shape = 's32[1]{0}', space=sflag, size = 0x4, scoped, tag = 'scoped memory for tpu_custom_call.1']
    #allocation5 [shape = 'u8[131072]{0}', space=vmem, size = 0x20000, scoped, tag = 'input window, operand 1, single buffered']
    #allocation6 [shape = 's32[1]{0}', space=sflag, size = 0x4, scoped, tag = 'scoped memory for tpu_custom_call.1']
    #allocation7 [shape = 'u8[131072]{0}', space=vmem, size = 0x20000, scoped, tag = 'input window, operand 2, single buffered']
    #allocation8 [shape = 'u8[1024]{0}', space=vmem, size = 0x400, scoped, tag = 'output window, operand 0, single buffered']
    %9 = vsyncpa [#allocation3], 0
    %10 = vsyncpa [#allocation6], 0
    %11 = vsyncpa [#allocation4], 0
    // Predicated region
    $region2: #{tpu_custom_call.1} parent=1 // pred_check
      _
    $region3: #{tpu_custom_call.1} parent=1 // pred_check_branch
      %13 = sbr.rel (0) target = $region5
    $region4: #{tpu_custom_call.1} parent=1 // pred_region
      %s15 = ssub.s32 32, 32
      %16 = vsyncadd [#allocation3], %s15
      %s18 = sshll.u32 [#allocation2], 4
      %s19 = int_to_ptr.vmem [resolvable:$true] %s18
      %21 = dma.hbm_to_vmem [thread:$0]  %s0, 32, %s19, [#allocation3]
    $region5: #{tpu_custom_call.1} parent=1 // pred_fallthru
      _
    // Predicated region
    $region6: #{tpu_custom_call.1} parent=1 // pred_check
      _
    $region7: #{tpu_custom_call.1} parent=1 // pred_check_branch
      %23 = sbr.rel (0) target = $region9
    $region8: #{tpu_custom_call.1} parent=1 // pred_region
      %s25 = ssub.s32 4096, 4096
      %26 = vsyncadd [#allocation6], %s25
      %s27 = sshll.u32 [#allocation5], 4
      %s28 = int_to_ptr.vmem [resolvable:$true] %s27
      %33 = dma.hbm_to_vmem [thread:$0]  %s1, 4096, %s28, [#allocation6], 128, 128, 8
    $region9: #{tpu_custom_call.1} parent=1 // pred_fallthru
      _
    // Predicated region
    $region10: #{tpu_custom_call.1} parent=1 // pred_check
      _
    $region11: #{tpu_custom_call.1} parent=1 // pred_check_branch
      %35 = sbr.rel (0) target = $region13
    $region12: #{tpu_custom_call.1} parent=1 // pred_region
      %s37 = ssub.s32 4096, 4096
      %38 = vsyncadd [#allocation6], %s37
      %s39 = sshll.u32 [#allocation7], 4
      %s40 = int_to_ptr.vmem [resolvable:$true] %s39
      %45 = dma.hbm_to_vmem [thread:$0]  %s2, 4096, %s40, [#allocation6], 128, 128, 8
    $region13: #{tpu_custom_call.1} parent=1 // pred_fallthru
      _
    // Predicated region
    $region14: #{tpu_custom_call.1} parent=1 // pred_check
      _
    $region15: #{tpu_custom_call.1} parent=1 // pred_check_branch
      %47 = sbr.rel (0) target = $region17
    $region16: #{tpu_custom_call.1} parent=1 // pred_region
      _
    $region17: #{tpu_custom_call.1} parent=1 // pred_fallthru
      _
    // Predicated region
    $region18: #{tpu_custom_call.1} parent=1 // pred_check
      _
    $region19: #{tpu_custom_call.1} parent=1 // pred_check_branch
      %49 = sbr.rel (0) target = $region21
    $region20: #{tpu_custom_call.1} parent=1 // pred_region
      %50 = dma.done [#allocation3], 32
    $region21: #{tpu_custom_call.1} parent=1 // pred_fallthru
      _
    // Predicated region
    $region22: #{tpu_custom_call.1} parent=1 // pred_check
      _
    $region23: #{tpu_custom_call.1} parent=1 // pred_check_branch
      %52 = sbr.rel (0) target = $region25
    $region24: #{tpu_custom_call.1} parent=1 // pred_region
      %53 = dma.done [#allocation6], 4096
    $region25: #{tpu_custom_call.1} parent=1 // pred_fallthru
      _
    // Predicated region
    $region26: #{tpu_custom_call.1} parent=1 // pred_check
      _
    $region27: #{tpu_custom_call.1} parent=1 // pred_check_branch
      %55 = sbr.rel (0) target = $region29
    $region28: #{tpu_custom_call.1} parent=1 // pred_region
      %56 = dma.done [#allocation6], 4096
    $region29: #{tpu_custom_call.1} parent=1 // pred_fallthru
      _
    %v57 = vld [vmem:[%s3] sm:$0x1]
    %v58 = vld [vmem:[%s3 + $0x1] sm:$0x1]
    %v59 = vld [vmem:[%s3 + $0x2] sm:$0x1]
    %v60 = vld [vmem:[#allocation2] sm:$0x3]
    %v61 = vld [vmem:[#allocation5] sm:$0xff]
    %v62 = vld [vmem:[#allocation5 + $0x8] sm:$0xff]
    %v63 = vld [vmem:[#allocation5 + $0x10] sm:$0xff]
    %v64 = vld [vmem:[#allocation5 + $0x18] sm:$0xff]
    %v65 = vld [vmem:[#allocation5 + $0x20] sm:$0xff]
    %v66 = vld [vmem:[#allocation5 + $0x28] sm:$0xff]
    %v67 = vld [vmem:[#allocation5 + $0x30] sm:$0xff]
    %v68 = vld [vmem:[#allocation5 + $0x38] sm:$0xff]
    %v69 = vld [vmem:[#allocation5 + $0x40] sm:$0xff]
    %v70 = vld [vmem:[#allocation5 + $0x48] sm:$0xff]
    %v71 = vld [vmem:[#allocation5 + $0x50] sm:$0xff]
    %v72 = vld [vmem:[#allocation5 + $0x58] sm:$0xff]
    %v73 = vld [vmem:[#allocation5 + $0x60] sm:$0xff]
    %v74 = vld [vmem:[#allocation5 + $0x68] sm:$0xff]
    %v75 = vld [vmem:[#allocation5 + $0x70] sm:$0xff]
    %v76 = vld [vmem:[#allocation5 + $0x78] sm:$0xff]
    %v77 = vld [vmem:[#allocation5 + $0x80] sm:$0xff]
    %v78 = vld [vmem:[#allocation5 + $0x88] sm:$0xff]
    %v79 = vld [vmem:[#allocation5 + $0x90] sm:$0xff]
    %v80 = vld [vmem:[#allocation5 + $0x98] sm:$0xff]
    %v81 = vld [vmem:[#allocation5 + $0xa0] sm:$0xff]
    %v82 = vld [vmem:[#allocation5 + $0xa8] sm:$0xff]
    %v83 = vld [vmem:[#allocation5 + $0xb0] sm:$0xff]
    %v84 = vld [vmem:[#allocation5 + $0xb8] sm:$0xff]
    %v85 = vld [vmem:[#allocation5 + $0xc0] sm:$0xff]
    %v86 = vld [vmem:[#allocation5 + $0xc8] sm:$0xff]
    %v87 = vld [vmem:[#allocation5 + $0xd0] sm:$0xff]
    %v88 = vld [vmem:[#allocation5 + $0xd8] sm:$0xff]
    %v89 = vld [vmem:[#allocation5 + $0xe0] sm:$0xff]
    %v90 = vld [vmem:[#allocation5 + $0xe8] sm:$0xff]
    %v91 = vld [vmem:[#allocation5 + $0xf0] sm:$0xff]
    %v92 = vld [vmem:[#allocation5 + $0xf8] sm:$0xff]
    %v93 = vlaneseq
    %v94 = vshrl.u32 %v93, 7
    %v95 = vsub.s32 0, %v94
    %v96 = vrot.slane %v57, %v95
    %v99 = vunpack.c.l.s4 1966171168
    %v100 = vunpack.c.0.s8 %v99
    %v101 = vlaneseq
    %v102 = vshrl.u32 %v101, 7
    %v103 = vsub.s32 %v100, %v102
    %v104 = vrot.slane %v60, %v103
    %v105 = vcombine.high %v104, %v104
    %v107 = vunpack.c.l.s4 1966171168
    %v108 = vunpack.c.0.s8 %v107
    %v109 = vlaneseq
    %v110 = vshrl.u32 %v109, 7
    %v111 = vsub.s32 %v108, %v110
    %v112 = vrot.slane %v104, %v111
    %v114 = vunpack.c.l.s4 1966171168
    %v115 = vunpack.c.0.s8 %v114
    %v116 = vlaneseq
    %v117 = vshrl.u32 %v116, 7
    %v118 = vsub.s32 %v115, %v117
    %v119 = vrot.slane %v105, %v118
    %122 = vmatprep.subr.mxu0 0.0
    %123 = vmatpush1.msra.mxu0 %v61
    %124 = vmatprep.subr.mxu0 0.0
    %125 = vmatpush1.msra.mxu0 %v62
    %126 = vmatprep.subr.mxu0 0.0
    %127 = vmatpush1.msra.mxu0 %v63
    %128 = vmatprep.subr.mxu0 0.0
    %129 = vmatpush1.msra.mxu0 %v64
    %130 = vmatprep.subr.mxu0 0.0
    %131 = vmatpush1.msra.mxu0 %v65
    %132 = vmatprep.subr.mxu0 0.0
    %133 = vmatpush1.msra.mxu0 %v66
    %134 = vmatprep.subr.mxu0 0.0
    %135 = vmatpush1.msra.mxu0 %v67
    %136 = vmatprep.subr.mxu0 0.0
    %137 = vmatpush1.msra.mxu0 %v68
    %138 = vmatprep.subr.mxu0 0.0
    %139 = vmatpush1.msra.mxu0 %v69
    %140 = vmatprep.subr.mxu0 0.0
    %141 = vmatpush1.msra.mxu0 %v70
    %142 = vmatprep.subr.mxu0 0.0
    %143 = vmatpush1.msra.mxu0 %v71
    %144 = vmatprep.subr.mxu0 0.0
    %145 = vmatpush1.msra.mxu0 %v72
    %146 = vmatprep.subr.mxu0 0.0
    %147 = vmatpush1.msra.mxu0 %v73
    %148 = vmatprep.subr.mxu0 0.0
    %149 = vmatpush1.msra.mxu0 %v74
    %150 = vmatprep.subr.mxu0 0.0
    %151 = vmatpush1.msra.mxu0 %v75
    %152 = vmatprep.subr.mxu0 0.0
    %153 = vmatpush1.msra.mxu0 %v76
    %154 = vmatprep.subr.mxu0 0.0
    %155 = vmatpush1.msra.mxu0 %v77
    %156 = vmatprep.subr.mxu0 0.0
    %157 = vmatpush1.msra.mxu0 %v78
    %158 = vmatprep.subr.mxu0 0.0
    %159 = vmatpush1.msra.mxu0 %v79
    %160 = vmatprep.subr.mxu0 0.0
    %161 = vmatpush1.msra.mxu0 %v80
    %162 = vmatprep.subr.mxu0 0.0
    %163 = vmatpush1.msra.mxu0 %v81
    %164 = vmatprep.subr.mxu0 0.0
    %165 = vmatpush1.msra.mxu0 %v82
    %166 = vmatprep.subr.mxu0 0.0
    %167 = vmatpush1.msra.mxu0 %v83
    %168 = vmatprep.subr.mxu0 0.0
    %169 = vmatpush1.msra.mxu0 %v84
    %170 = vmatprep.subr.mxu0 0.0
    %171 = vmatpush1.msra.mxu0 %v85
    %172 = vmatprep.subr.mxu0 0.0
    %173 = vmatpush1.msra.mxu0 %v86
    %174 = vmatprep.subr.mxu0 0.0
    %175 = vmatpush1.msra.mxu0 %v87
    %176 = vmatprep.subr.mxu0 0.0
    %177 = vmatpush1.msra.mxu0 %v88
    %178 = vmatprep.subr.mxu0 0.0
    %179 = vmatpush1.msra.mxu0 %v89
    %180 = vmatprep.subr.mxu0 0.0
    %181 = vmatpush1.msra.mxu0 %v90
    %182 = vmatprep.subr.mxu0 0.0
    %183 = vmatpush1.msra.mxu0 %v91
    %184 = vmatprep.subr.mxu0 0.0
    %185 = vmatpush1.msra.mxu0 %v92
    %186 = vmatprep.mubr.bf16.mxu0 %v119
    %187 = vmatmul.mubr.bf16.gmra.mrb[0].mxu0 %v112
    %v188 = vpop.f32.mrb[0].mxu0
    %v189 = vadd.f32 %v96, %v188
    %v190 = vpop.f32.mrb[0].mxu0
    %v191 = vpop.f32.mrb[0].mxu0
    %v192 = vpop.f32.mrb[0].mxu0
    %193 = vdwg.mxu0
    %v194 = vmax.f32 %v189, 0.0
    %v195 = vld [vmem:[#allocation7] sm:$0xff]
    %v196 = vld [vmem:[#allocation7 + $0x8] sm:$0xff]
    %v197 = vld [vmem:[#allocation7 + $0x10] sm:$0xff]
    %v198 = vld [vmem:[#allocation7 + $0x18] sm:$0xff]
    %v199 = vld [vmem:[#allocation7 + $0x20] sm:$0xff]
    %v200 = vld [vmem:[#allocation7 + $0x28] sm:$0xff]
    %v201 = vld [vmem:[#allocation7 + $0x30] sm:$0xff]
    %v202 = vld [vmem:[#allocation7 + $0x38] sm:$0xff]
    %v203 = vld [vmem:[#allocation7 + $0x40] sm:$0xff]
    %v204 = vld [vmem:[#allocation7 + $0x48] sm:$0xff]
    %v205 = vld [vmem:[#allocation7 + $0x50] sm:$0xff]
    %v206 = vld [vmem:[#allocation7 + $0x58] sm:$0xff]
    %v207 = vld [vmem:[#allocation7 + $0x60] sm:$0xff]
    %v208 = vld [vmem:[#allocation7 + $0x68] sm:$0xff]
    %v209 = vld [vmem:[#allocation7 + $0x70] sm:$0xff]
    %v210 = vld [vmem:[#allocation7 + $0x78] sm:$0xff]
    %v211 = vlaneseq
    %v212 = vshrl.u32 %v211, 7
    %v213 = vsub.s32 0, %v212
    %v214 = vrot.slane %v58, %v213
    %215 = vmatprep.subr.mxu0 0.0
    %216 = vmatpush1.msra.mxu0 %v195
    %217 = vmatprep.subr.mxu0 0.0
    %218 = vmatpush1.msra.mxu0 %v196
    %219 = vmatprep.subr.mxu0 0.0
    %220 = vmatpush1.msra.mxu0 %v197
    %221 = vmatprep.subr.mxu0 0.0
    %222 = vmatpush1.msra.mxu0 %v198
    %223 = vmatprep.subr.mxu0 0.0
    %224 = vmatpush1.msra.mxu0 %v199
    %225 = vmatprep.subr.mxu0 0.0
    %226 = vmatpush1.msra.mxu0 %v200
    %227 = vmatprep.subr.mxu0 0.0
    %228 = vmatpush1.msra.mxu0 %v201
    %229 = vmatprep.subr.mxu0 0.0
    %230 = vmatpush1.msra.mxu0 %v202
    %231 = vmatprep.subr.mxu0 0.0
    %232 = vmatpush1.msra.mxu0 %v203
    %233 = vmatprep.subr.mxu0 0.0
    %234 = vmatpush1.msra.mxu0 %v204
    %235 = vmatprep.subr.mxu0 0.0
    %236 = vmatpush1.msra.mxu0 %v205
    %237 = vmatprep.subr.mxu0 0.0
    %238 = vmatpush1.msra.mxu0 %v206
    %239 = vmatprep.subr.mxu0 0.0
    %240 = vmatpush1.msra.mxu0 %v207
    %241 = vmatprep.subr.mxu0 0.0
    %242 = vmatpush1.msra.mxu0 %v208
    %243 = vmatprep.subr.mxu0 0.0
    %244 = vmatpush1.msra.mxu0 %v209
    %245 = vmatprep.subr.mxu0 0.0
    %246 = vmatpush1.msra.mxu0 %v210
    %247 = vmatprep.subr.mxu0 0.0
    %248 = vmatpush1.msra.mxu0 0.0
    %249 = vmatprep.subr.mxu0 0.0
    %250 = vmatpush1.msra.mxu0 0.0
    %251 = vmatprep.subr.mxu0 0.0
    %252 = vmatpush1.msra.mxu0 0.0
    %253 = vmatprep.subr.mxu0 0.0
    %254 = vmatpush1.msra.mxu0 0.0
    %255 = vmatprep.subr.mxu0 0.0
    %256 = vmatpush1.msra.mxu0 0.0
    %257 = vmatprep.subr.mxu0 0.0
    %258 = vmatpush1.msra.mxu0 0.0
    %259 = vmatprep.subr.mxu0 0.0
    %260 = vmatpush1.msra.mxu0 0.0
    %261 = vmatprep.subr.mxu0 0.0
    %262 = vmatpush1.msra.mxu0 0.0
    %263 = vmatprep.subr.mxu0 0.0
    %264 = vmatpush1.msra.mxu0 0.0
    %265 = vmatprep.subr.mxu0 0.0
    %266 = vmatpush1.msra.mxu0 0.0
    %267 = vmatprep.subr.mxu0 0.0
    %268 = vmatpush1.msra.mxu0 0.0
    %269 = vmatprep.subr.mxu0 0.0
    %270 = vmatpush1.msra.mxu0 0.0
    %271 = vmatprep.subr.mxu0 0.0
    %272 = vmatpush1.msra.mxu0 0.0
    %273 = vmatprep.subr.mxu0 0.0
    %274 = vmatpush1.msra.mxu0 0.0
    %275 = vmatprep.subr.mxu0 0.0
    %276 = vmatpush1.msra.mxu0 0.0
    %277 = vmatprep.subr.mxu0 0.0
    %278 = vmatpush1.msra.mxu0 0.0
    %279 = vmatprep.mubr.f32.mxu0 0.0
    %280 = vmatmul.mubr.f32.gmra.mrb[0].mxu0 %v194
    %v281 = vpop.f32.mrb[0].mxu0
    %v282 = vadd.f32 %v214, %v281
    %v283 = vpop.f32.mrb[0].mxu0
    %284 = vdwg.mxu0
    %v285 = vmax.f32 %v282, 0.0
    %s286 = scalar_lea.vmem [#allocation7], 128
    %v287 = vld [vmem:[%s286] sm:$0xff]
    %v288 = vld [vmem:[%s286 + $0x8] sm:$0xff]
    %v289 = vld [vmem:[%s286 + $0x10] sm:$0xff]
    %v290 = vld [vmem:[%s286 + $0x18] sm:$0xff]
    %v291 = vld [vmem:[%s286 + $0x20] sm:$0xff]
    %v292 = vld [vmem:[%s286 + $0x28] sm:$0xff]
    %v293 = vld [vmem:[%s286 + $0x30] sm:$0xff]
    %v294 = vld [vmem:[%s286 + $0x38] sm:$0xff]
    %v295 = vld [vmem:[%s286 + $0x40] sm:$0xff]
    %v296 = vld [vmem:[%s286 + $0x48] sm:$0xff]
    %v297 = vld [vmem:[%s286 + $0x50] sm:$0xff]
    %v298 = vld [vmem:[%s286 + $0x58] sm:$0xff]
    %v299 = vld [vmem:[%s286 + $0x60] sm:$0xff]
    %v300 = vld [vmem:[%s286 + $0x68] sm:$0xff]
    %v301 = vld [vmem:[%s286 + $0x70] sm:$0xff]
    %v302 = vld [vmem:[%s286 + $0x78] sm:$0xff]
    %v303 = vlaneseq
    %v304 = vshrl.u32 %v303, 7
    %v305 = vsub.s32 0, %v304
    %v306 = vrot.slane %v59, %v305
    %307 = vmatprep.subr.mxu0 0.0
    %308 = vmatpush1.msra.mxu0 %v287
    %309 = vmatprep.subr.mxu0 0.0
    %310 = vmatpush1.msra.mxu0 %v288
    %311 = vmatprep.subr.mxu0 0.0
    %312 = vmatpush1.msra.mxu0 %v289
    %313 = vmatprep.subr.mxu0 0.0
    %314 = vmatpush1.msra.mxu0 %v290
    %315 = vmatprep.subr.mxu0 0.0
    %316 = vmatpush1.msra.mxu0 %v291
    %317 = vmatprep.subr.mxu0 0.0
    %318 = vmatpush1.msra.mxu0 %v292
    %319 = vmatprep.subr.mxu0 0.0
    %320 = vmatpush1.msra.mxu0 %v293
    %321 = vmatprep.subr.mxu0 0.0
    %322 = vmatpush1.msra.mxu0 %v294
    %323 = vmatprep.subr.mxu0 0.0
    %324 = vmatpush1.msra.mxu0 %v295
    %325 = vmatprep.subr.mxu0 0.0
    %326 = vmatpush1.msra.mxu0 %v296
    %327 = vmatprep.subr.mxu0 0.0
    %328 = vmatpush1.msra.mxu0 %v297
    %329 = vmatprep.subr.mxu0 0.0
    %330 = vmatpush1.msra.mxu0 %v298
    %331 = vmatprep.subr.mxu0 0.0
    %332 = vmatpush1.msra.mxu0 %v299
    %333 = vmatprep.subr.mxu0 0.0
    %334 = vmatpush1.msra.mxu0 %v300
    %335 = vmatprep.subr.mxu0 0.0
    %336 = vmatpush1.msra.mxu0 %v301
    %337 = vmatprep.subr.mxu0 0.0
    %338 = vmatpush1.msra.mxu0 %v302
    %339 = vmatprep.subr.mxu0 0.0
    %340 = vmatpush1.msra.mxu0 0.0
    %341 = vmatprep.subr.mxu0 0.0
    %342 = vmatpush1.msra.mxu0 0.0
    %343 = vmatprep.subr.mxu0 0.0
    %344 = vmatpush1.msra.mxu0 0.0
    %345 = vmatprep.subr.mxu0 0.0
    %346 = vmatpush1.msra.mxu0 0.0
    %347 = vmatprep.subr.mxu0 0.0
    %348 = vmatpush1.msra.mxu0 0.0
    %349 = vmatprep.subr.mxu0 0.0
    %350 = vmatpush1.msra.mxu0 0.0
    %351 = vmatprep.subr.mxu0 0.0
    %352 = vmatpush1.msra.mxu0 0.0
    %353 = vmatprep.subr.mxu0 0.0
    %354 = vmatpush1.msra.mxu0 0.0
    %355 = vmatprep.subr.mxu0 0.0
    %356 = vmatpush1.msra.mxu0 0.0
    %357 = vmatprep.subr.mxu0 0.0
    %358 = vmatpush1.msra.mxu0 0.0
    %359 = vmatprep.subr.mxu0 0.0
    %360 = vmatpush1.msra.mxu0 0.0
    %361 = vmatprep.subr.mxu0 0.0
    %362 = vmatpush1.msra.mxu0 0.0
    %363 = vmatprep.subr.mxu0 0.0
    %364 = vmatpush1.msra.mxu0 0.0
    %365 = vmatprep.subr.mxu0 0.0
    %366 = vmatpush1.msra.mxu0 0.0
    %367 = vmatprep.subr.mxu0 0.0
    %368 = vmatpush1.msra.mxu0 0.0
    %369 = vmatprep.subr.mxu0 0.0
    %370 = vmatpush1.msra.mxu0 0.0
    %371 = vmatprep.mubr.f32.mxu0 0.0
    %372 = vmatmul.mubr.f32.gmra.mrb[0].mxu0 %v285
    %v373 = vpop.f32.mrb[0].mxu0
    %v374 = vadd.f32 %v306, %v373
    %v375 = vpop.f32.mrb[0].mxu0
    %376 = vdwg.mxu0
    %vm377 = vcmask 1041408
    %v378 = vsel %vm377, %v374, -inf
    %379 = vmax.xlane.f32.xlu0 %v378
    %v380 = vpop.xlane.xlu0 %379
    %v381 = vsub.f32 %v374, %v380
    %v382 = vmul.f32 %v381, 1.442695
    %v383 = vpow.pop %v382
    %v384 = vsel %vm377, %v383, 0.0
    %385 = vadd.xlane.f32.xlu0 %v384
    %v386 = vpop.xlane.xlu0 %385
    %v387 = vlog2.pop %v386
    %v388 = vmul.f32 %v387, 0.6931472
    %v389 = vsub.f32 %v381, %v388
    %vm390 = vcmask 33792
    %391 = vst.msk [vmem:[#allocation8] sm:$0x3] %vm390, %v389
    // Predicated region
    $region30: #{tpu_custom_call.1} parent=1 // pred_check
      _
    $region31: #{tpu_custom_call.1} parent=1 // pred_check_branch
      %393 = sbr.rel (0) target = $region33
    $region32: #{tpu_custom_call.1} parent=1 // pred_region
      %s395 = ssub.s32 32, 32
      %396 = vsyncadd [#allocation4], %s395
      %s398 = sshll.u32 [#allocation8], 4
      %s399 = int_to_ptr.vmem [resolvable:$true] %s398
      %401 = dma.vmem_to_hbm [thread:$0]  %s399, 32, %s4, [#allocation4]
    $region33: #{tpu_custom_call.1} parent=1 // pred_fallthru
      _
    // Predicated region
    $region34: #{tpu_custom_call.1} parent=1 // pred_check
      _
    $region35: #{tpu_custom_call.1} parent=1 // pred_check_branch
      %403 = sbr.rel (0) target = $region37
    $region36: #{tpu_custom_call.1} parent=1 // pred_region
      %404 = dma.done [#allocation4], 32
    $region37: #{tpu_custom_call.1} parent=1 // pred_fallthru
      _
    %405 = vsyncpa [#allocation3], 1
    %406 = vsyncpa [#allocation6], 1
    %407 = vsyncpa [#allocation4], 1

</llo_original>
